<compile_context>
chip_gen: v7x
topology: tpu7x:2x2x1
jax: 0.10.0
libtpu: 0.0.40
codegen_flags: <defaults>
</compile_context>

<pallas_src>
import functools

import jax
import jax.numpy as jnp
from jax.experimental import pallas as pl
from jax.experimental.pallas import tpu as pltpu

LN_EPS = 1e-5


def _ffn_residual_kernel(x_ref, w1_ref, b1_ref, g_ref, beta_ref, w2_ref, b2_ref,
                         o_ref, *, matmul_dtype):
    # x_ref: (TILE_N, D), w1: (D, H), b1/g/beta: (1, H), w2: (H, D), b2: (1, D)
    x = x_ref[...]
    xf = x if x.dtype == jnp.float32 else x.astype(jnp.float32)

    # Linear 1 (MXU) + ReLU (VPU). Optionally feed bf16 into the MXU, accumulate in f32.
    a = xf if matmul_dtype is None else xf.astype(matmul_dtype)
    w1 = w1_ref[...] if matmul_dtype is None else w1_ref[...].astype(matmul_dtype)
    h = jnp.dot(a, w1, preferred_element_type=jnp.float32) + b1_ref[...]
    h = jnp.maximum(h, 0.0)

    # LayerNorm over the hidden dim in f32 (biased variance, matches torch.nn.LayerNorm).
    mean = jnp.mean(h, axis=-1, keepdims=True)
    centered = h - mean
    var = jnp.mean(centered * centered, axis=-1, keepdims=True)
    hn = centered * jax.lax.rsqrt(var + LN_EPS)
    hn = hn * g_ref[...] + beta_ref[...]

    # Linear 2 (MXU) + residual add.
    b = hn if matmul_dtype is None else hn.astype(matmul_dtype)
    w2 = w2_ref[...] if matmul_dtype is None else w2_ref[...].astype(matmul_dtype)
    y = jnp.dot(b, w2, preferred_element_type=jnp.float32) + b2_ref[...]

    o_ref[...] = (xf + y).astype(o_ref.dtype)


def _round_up(v, m):
    return (v + m - 1) // m * m


def feed_forward_residual_block(x, w1, b1, gamma, beta, w2, b2, *,
                                tile_n=256, matmul_dtype=None):
    """x: (B, S, D). Returns x + Linear2(LayerNorm(ReLU(Linear1(x))))."""
    B, S, D = x.shape
    H = w1.shape[1]
    N = B * S

    # Row tile: large enough to fill the MXU / amortize per-step overhead, but never
    # larger than (rounded-up) N. Always a multiple of 8 (sublane).
    tile_n = max(8, min(int(tile_n), _round_up(N, 8)))
    n_pad = _round_up(N, tile_n)

    x2d = x.reshape(N, D)
    if n_pad != N:
        # Padded rows are independent garbage (LN is per-row); sliced off afterwards.
        x2d = jnp.pad(x2d, ((0, n_pad - N), (0, 0)))

    b1_2d = b1.reshape(1, H)
    g_2d = gamma.reshape(1, H)
    be_2d = beta.reshape(1, H)
    b2_2d = b2.reshape(1, D)

    grid = (n_pad // tile_n,)
    full = lambda i: (0, 0)
    row = lambda i: (i, 0)

    # VMEM budget (f32): resident weights (x2 if double-buffered fallback) + double-buffered
    # x/out row tiles + generous in-kernel hidden intermediates. Clamp to <=48 MiB (safe on
    # v7x's 64 MiB physical VMEM) and >=32 MiB.
    itemsize = 4
    weight_bytes = (2 * D * H + 2 * H + 2 * D) * itemsize
    io_bytes = 2 * 2 * tile_n * D * itemsize
    hidden_bytes = 4 * tile_n * H * itemsize
    vmem_need = 2 * weight_bytes + io_bytes + hidden_bytes
    vmem_limit = int(min(max(32 * 1024 * 1024, 2 * vmem_need), 48 * 1024 * 1024))

    cost = pl.CostEstimate(
        flops=2 * n_pad * (D * H + H * D) + 10 * n_pad * H,
        transcendentals=n_pad,          # one rsqrt per row
        bytes_accessed=(2 * n_pad * D + 2 * D * H + 2 * H + 2 * D) * itemsize,
    )

    kernel = functools.partial(_ffn_residual_kernel, matmul_dtype=matmul_dtype)

    def build(single_buffer_weights):
        w_kwargs = {}
        if single_buffer_weights:
            # Grid-invariant operands: one VMEM buffer is enough (index_map is constant).
            w_kwargs = dict(pipeline_mode=pl.Buffered(buffer_count=1))
        in_specs = [
            pl.BlockSpec((tile_n, D), row),              # x rows (double-buffered)
            pl.BlockSpec((D, H), full, **w_kwargs),      # W1
            pl.BlockSpec((1, H), full, **w_kwargs),      # b1
            pl.BlockSpec((1, H), full, **w_kwargs),      # LN gamma
            pl.BlockSpec((1, H), full, **w_kwargs),      # LN beta
            pl.BlockSpec((H, D), full, **w_kwargs),      # W2
            pl.BlockSpec((1, D), full, **w_kwargs),      # b2
        ]
        return pl.pallas_call(
            kernel,
            out_shape=jax.ShapeDtypeStruct((n_pad, D), x.dtype),
            grid_spec=pltpu.PrefetchScalarGridSpec(
                num_scalar_prefetch=0,
                grid=grid,
                in_specs=in_specs,
                out_specs=pl.BlockSpec((tile_n, D), row),
            ),
            compiler_params=pltpu.CompilerParams(
                dimension_semantics=("parallel",),
                vmem_limit_bytes=vmem_limit,
            ),
            cost_estimate=cost,
        )

    args = (x2d, w1, b1_2d, g_2d, be_2d, w2, b2_2d)
    try:
        out2d = jax.block_until_ready(build(True)(*args))
    except Exception:
        # Fallback if this JAX version rejects single-buffered pipeline_mode.
        out2d = jax.block_until_ready(build(False)(*args))

    if n_pad != N:
        out2d = out2d[:N]
    return out2d.reshape(B, S, D)


def reference(x, w1, b1, gamma, beta, w2, b2):
    h = jnp.maximum(x @ w1 + b1, 0.0)
    mean = jnp.mean(h, axis=-1, keepdims=True)
    var = jnp.mean((h - mean) ** 2, axis=-1, keepdims=True)
    hn = (h - mean) / jnp.sqrt(var + LN_EPS) * gamma + beta
    return x + (hn @ w2 + b2)


if __name__ == "__main__":
    B, S, D = 2, 8, 32           # dim = 32
    EXP = 2                      # expansion_multiplier
    H = D * EXP                  # hidden = 64

    key = jax.random.PRNGKey(0)
    kx, k1, k2, k3, k4, k5, k6 = jax.random.split(key, 7)

    x = jax.random.normal(kx, (B, S, D), dtype=jnp.float32)

    # Deterministic parameter init (shapes per nn.Linear / nn.LayerNorm).
    w1 = jax.random.normal(k1, (D, H), dtype=jnp.float32) * 0.1
    b1 = jax.random.normal(k2, (H,), dtype=jnp.float32) * 0.1
    gamma = 1.0 + 0.05 * jax.random.normal(k3, (H,), dtype=jnp.float32)
    beta = 0.05 * jax.random.normal(k4, (H,), dtype=jnp.float32)
    w2 = jax.random.normal(k5, (H, D), dtype=jnp.float32) * 0.1
    b2 = jax.random.normal(k6, (D,), dtype=jnp.float32) * 0.1

    out = feed_forward_residual_block(x, w1, b1, gamma, beta, w2, b2)
    out = jax.block_until_ready(out)

    ref = reference(x, w1, b1, gamma, beta, w2, b2)
    assert out.shape == (B, S, D)
    assert jnp.allclose(out, ref, atol=1e-4, rtol=1e-4), "mismatch vs reference"

    print("KERNEL_OK")
</pallas_src>

<mosaic_0001>
module attributes {stable_mosaic.version = 11 : i64} {
  func.func @_ffn_residual_kernel(%arg0: i32, %arg1: memref<16x32xf32, #tpu.memory_space<vmem>>, %arg2: memref<32x64xf32, #tpu.memory_space<vmem>>, %arg3: memref<1x64xf32, #tpu.memory_space<vmem>>, %arg4: memref<1x64xf32, #tpu.memory_space<vmem>>, %arg5: memref<1x64xf32, #tpu.memory_space<vmem>>, %arg6: memref<64x32xf32, #tpu.memory_space<vmem>>, %arg7: memref<1x32xf32, #tpu.memory_space<vmem>>, %arg8: memref<16x32xf32, #tpu.memory_space<vmem>>) attributes {dimension_semantics = [#tpu.dimension_semantics<parallel>], iteration_bounds = array<i64: 1>, scalar_prefetch = 0 : i64, scratch_operands = 0 : i64, tpu.core_type = #tpu.core_type<tc>, window_params = [{transform_indices = @transform_0, window_bounds = array<i64: 16, 32>}, {pipeline_mode = #tpu.pipeline_mode<synchronous>, transform_indices = @transform_1, window_bounds = array<i64: 32, 64>}, {pipeline_mode = #tpu.pipeline_mode<synchronous>, transform_indices = @transform_2, window_bounds = array<i64: 1, 64>}, {pipeline_mode = #tpu.pipeline_mode<synchronous>, transform_indices = @transform_3, window_bounds = array<i64: 1, 64>}, {pipeline_mode = #tpu.pipeline_mode<synchronous>, transform_indices = @transform_4, window_bounds = array<i64: 1, 64>}, {pipeline_mode = #tpu.pipeline_mode<synchronous>, transform_indices = @transform_5, window_bounds = array<i64: 64, 32>}, {pipeline_mode = #tpu.pipeline_mode<synchronous>, transform_indices = @transform_6, window_bounds = array<i64: 1, 32>}, {transform_indices = @transform_7, window_bounds = array<i64: 16, 32>}]} {
    %c0 = arith.constant 0 : index
    %c0_0 = arith.constant 0 : index
    %0 = vector.load %arg1[%c0, %c0_0] : memref<16x32xf32, #tpu.memory_space<vmem>>, vector<16x32xf32>
    %c0_1 = arith.constant 0 : index
    %c0_2 = arith.constant 0 : index
    %1 = vector.load %arg2[%c0_1, %c0_2] : memref<32x64xf32, #tpu.memory_space<vmem>>, vector<32x64xf32>
    %cst = arith.constant dense<0.000000e+00> : vector<16x64xf32>
    %2 = tpu.matmul %0, %1, %cst {dimension_numbers = #tpu.dot_dimension_numbers<[1], [0], [0], [1], [0, 0, 1, 1], [], []>} : vector<16x32xf32>, vector<32x64xf32>, vector<16x64xf32> -> vector<16x64xf32>
    %c0_3 = arith.constant 0 : index
    %c0_4 = arith.constant 0 : index
    %3 = vector.load %arg3[%c0_3, %c0_4] : memref<1x64xf32, #tpu.memory_space<vmem>>, vector<1x64xf32>
    %4 = vector.broadcast %3 : vector<1x64xf32> to vector<16x64xf32>
    %5 = arith.addf %2, %4 : vector<16x64xf32>
    %cst_5 = arith.constant 0.000000e+00 : f32
    %6 = vector.broadcast %cst_5 : f32 to vector<16x64xf32>
    %7 = arith.maximumf %5, %6 : vector<16x64xf32>
    %cst_6 = arith.constant dense<0.000000e+00> : vector<16xf32>
    %8 = vector.multi_reduction <add>, %7, %cst_6 [1] : vector<16x64xf32> to vector<16xf32>
    %9 = vector.shape_cast %8 : vector<16xf32> to vector<16x1xf32>
    %cst_7 = arith.constant 6.400000e+01 : f32
    %10 = vector.broadcast %cst_7 : f32 to vector<16x1xf32>
    %11 = arith.divf %9, %10 : vector<16x1xf32>
    %12 = vector.broadcast %11 : vector<16x1xf32> to vector<16x64xf32>
    %13 = arith.subf %7, %12 : vector<16x64xf32>
    %14 = arith.mulf %13, %13 : vector<16x64xf32>
    %cst_8 = arith.constant dense<0.000000e+00> : vector<16xf32>
    %15 = vector.multi_reduction <add>, %14, %cst_8 [1] : vector<16x64xf32> to vector<16xf32>
    %16 = vector.shape_cast %15 : vector<16xf32> to vector<16x1xf32>
    %cst_9 = arith.constant 6.400000e+01 : f32
    %17 = vector.broadcast %cst_9 : f32 to vector<16x1xf32>
    %18 = arith.divf %16, %17 : vector<16x1xf32>
    %cst_10 = arith.constant 9.99999974E-6 : f32
    %19 = vector.broadcast %cst_10 : f32 to vector<16x1xf32>
    %20 = arith.addf %18, %19 : vector<16x1xf32>
    %21 = math.rsqrt %20 : vector<16x1xf32>
    %22 = vector.broadcast %21 : vector<16x1xf32> to vector<16x64xf32>
    %23 = arith.mulf %13, %22 : vector<16x64xf32>
    %c0_11 = arith.constant 0 : index
    %c0_12 = arith.constant 0 : index
    %24 = vector.load %arg4[%c0_11, %c0_12] : memref<1x64xf32, #tpu.memory_space<vmem>>, vector<1x64xf32>
    %25 = vector.broadcast %24 : vector<1x64xf32> to vector<16x64xf32>
    %26 = arith.mulf %23, %25 : vector<16x64xf32>
    %c0_13 = arith.constant 0 : index
    %c0_14 = arith.constant 0 : index
    %27 = vector.load %arg5[%c0_13, %c0_14] : memref<1x64xf32, #tpu.memory_space<vmem>>, vector<1x64xf32>
    %28 = vector.broadcast %27 : vector<1x64xf32> to vector<16x64xf32>
    %29 = arith.addf %26, %28 : vector<16x64xf32>
    %c0_15 = arith.constant 0 : index
    %c0_16 = arith.constant 0 : index
    %30 = vector.load %arg6[%c0_15, %c0_16] : memref<64x32xf32, #tpu.memory_space<vmem>>, vector<64x32xf32>
    %cst_17 = arith.constant dense<0.000000e+00> : vector<16x32xf32>
    %31 = tpu.matmul %29, %30, %cst_17 {dimension_numbers = #tpu.dot_dimension_numbers<[1], [0], [0], [1], [0, 0, 1, 1], [], []>} : vector<16x64xf32>, vector<64x32xf32>, vector<16x32xf32> -> vector<16x32xf32>
    %c0_18 = arith.constant 0 : index
    %c0_19 = arith.constant 0 : index
    %32 = vector.load %arg7[%c0_18, %c0_19] : memref<1x32xf32, #tpu.memory_space<vmem>>, vector<1x32xf32>
    %33 = vector.broadcast %32 : vector<1x32xf32> to vector<16x32xf32>
    %34 = arith.addf %31, %33 : vector<16x32xf32>
    %35 = arith.addf %0, %34 : vector<16x32xf32>
    %c0_20 = arith.constant 0 : index
    %c0_21 = arith.constant 0 : index
    %36 = vector.load %arg8[%c0_20, %c0_21] : memref<16x32xf32, #tpu.memory_space<vmem>>, vector<16x32xf32>
    tpu.vector_store %arg8[%c0_20, %c0_21], %35 {strides = array<i32>} : memref<16x32xf32, #tpu.memory_space<vmem>>, vector<16x32xf32>,
    return
  }
  func.func @transform_0(%arg0: i32) -> (i32, i32) {
    %c0_i32 = arith.constant 0 : i32
    %c0_i32_0 = arith.constant 0 : i32
    return %arg0, %c0_i32 : i32, i32
  }
  func.func @transform_1(%arg0: i32) -> (i32, i32) {
    %c0_i32 = arith.constant 0 : i32
    %c0_i32_0 = arith.constant 0 : i32
    %c0_i32_1 = arith.constant 0 : i32
    return %c0_i32, %c0_i32_0 : i32, i32
  }
  func.func @transform_2(%arg0: i32) -> (i32, i32) {
    %c0_i32 = arith.constant 0 : i32
    %c0_i32_0 = arith.constant 0 : i32
    %c0_i32_1 = arith.constant 0 : i32
    return %c0_i32, %c0_i32_0 : i32, i32
  }
  func.func @transform_3(%arg0: i32) -> (i32, i32) {
    %c0_i32 = arith.constant 0 : i32
    %c0_i32_0 = arith.constant 0 : i32
    %c0_i32_1 = arith.constant 0 : i32
    return %c0_i32, %c0_i32_0 : i32, i32
  }
  func.func @transform_4(%arg0: i32) -> (i32, i32) {
    %c0_i32 = arith.constant 0 : i32
    %c0_i32_0 = arith.constant 0 : i32
    %c0_i32_1 = arith.constant 0 : i32
    return %c0_i32, %c0_i32_0 : i32, i32
  }
  func.func @transform_5(%arg0: i32) -> (i32, i32) {
    %c0_i32 = arith.constant 0 : i32
    %c0_i32_0 = arith.constant 0 : i32
    %c0_i32_1 = arith.constant 0 : i32
    return %c0_i32, %c0_i32_0 : i32, i32
  }
  func.func @transform_6(%arg0: i32) -> (i32, i32) {
    %c0_i32 = arith.constant 0 : i32
    %c0_i32_0 = arith.constant 0 : i32
    %c0_i32_1 = arith.constant 0 : i32
    return %c0_i32, %c0_i32_0 : i32, i32
  }
  func.func @transform_7(%arg0: i32) -> (i32, i32) {
    %c0_i32 = arith.constant 0 : i32
    %c0_i32_0 = arith.constant 0 : i32
    return %arg0, %c0_i32 : i32, i32
  }
}

module attributes {stable_mosaic.version = 11 : i64} {
  func.func @_ffn_residual_kernel(%arg0: i32, %arg1: memref<16x32xf32, #tpu.memory_space<vmem>>, %arg2: memref<32x64xf32, #tpu.memory_space<vmem>>, %arg3: memref<1x64xf32, #tpu.memory_space<vmem>>, %arg4: memref<1x64xf32, #tpu.memory_space<vmem>>, %arg5: memref<1x64xf32, #tpu.memory_space<vmem>>, %arg6: memref<64x32xf32, #tpu.memory_space<vmem>>, %arg7: memref<1x32xf32, #tpu.memory_space<vmem>>, %arg8: memref<16x32xf32, #tpu.memory_space<vmem>>) attributes {dimension_semantics = [#tpu.dimension_semantics<parallel>], iteration_bounds = array<i64: 1>, scalar_prefetch = 0 : i64, scratch_operands = 0 : i64, tpu.core_type = #tpu.core_type<tc>, window_params = [{transform_indices = @transform_0, window_bounds = array<i64: 16, 32>}, {pipeline_mode = #tpu.pipeline_mode<synchronous>, transform_indices = @transform_1, window_bounds = array<i64: 32, 64>}, {pipeline_mode = #tpu.pipeline_mode<synchronous>, transform_indices = @transform_2, window_bounds = array<i64: 1, 64>}, {pipeline_mode = #tpu.pipeline_mode<synchronous>, transform_indices = @transform_3, window_bounds = array<i64: 1, 64>}, {pipeline_mode = #tpu.pipeline_mode<synchronous>, transform_indices = @transform_4, window_bounds = array<i64: 1, 64>}, {pipeline_mode = #tpu.pipeline_mode<synchronous>, transform_indices = @transform_5, window_bounds = array<i64: 64, 32>}, {pipeline_mode = #tpu.pipeline_mode<synchronous>, transform_indices = @transform_6, window_bounds = array<i64: 1, 32>}, {transform_indices = @transform_7, window_bounds = array<i64: 16, 32>}]} {
    %c0 = arith.constant 0 : index
    %c0_0 = arith.constant 0 : index
    %0 = vector.load %arg1[%c0, %c0_0] : memref<16x32xf32, #tpu.memory_space<vmem>>, vector<16x32xf32>
    %c0_1 = arith.constant 0 : index
    %c0_2 = arith.constant 0 : index
    %1 = vector.load %arg2[%c0_1, %c0_2] : memref<32x64xf32, #tpu.memory_space<vmem>>, vector<32x64xf32>
    %cst = arith.constant dense<0.000000e+00> : vector<16x64xf32>
    %2 = tpu.matmul %0, %1, %cst {dimension_numbers = #tpu.dot_dimension_numbers<[1], [0], [0], [1], [0, 0, 1, 1], [], []>} : vector<16x32xf32>, vector<32x64xf32>, vector<16x64xf32> -> vector<16x64xf32>
    %c0_3 = arith.constant 0 : index
    %c0_4 = arith.constant 0 : index
    %3 = vector.load %arg3[%c0_3, %c0_4] : memref<1x64xf32, #tpu.memory_space<vmem>>, vector<1x64xf32>
    %4 = vector.broadcast %3 : vector<1x64xf32> to vector<16x64xf32>
    %5 = arith.addf %2, %4 : vector<16x64xf32>
    %cst_5 = arith.constant 0.000000e+00 : f32
    %6 = vector.broadcast %cst_5 : f32 to vector<16x64xf32>
    %7 = arith.maximumf %5, %6 : vector<16x64xf32>
    %cst_6 = arith.constant dense<0.000000e+00> : vector<16xf32>
    %8 = vector.multi_reduction <add>, %7, %cst_6 [1] : vector<16x64xf32> to vector<16xf32>
    %9 = vector.shape_cast %8 : vector<16xf32> to vector<16x1xf32>
    %cst_7 = arith.constant 6.400000e+01 : f32
    %10 = vector.broadcast %cst_7 : f32 to vector<16x1xf32>
    %11 = arith.divf %9, %10 : vector<16x1xf32>
    %12 = vector.broadcast %11 : vector<16x1xf32> to vector<16x64xf32>
    %13 = arith.subf %7, %12 : vector<16x64xf32>
    %14 = arith.mulf %13, %13 : vector<16x64xf32>
    %cst_8 = arith.constant dense<0.000000e+00> : vector<16xf32>
    %15 = vector.multi_reduction <add>, %14, %cst_8 [1] : vector<16x64xf32> to vector<16xf32>
    %16 = vector.shape_cast %15 : vector<16xf32> to vector<16x1xf32>
    %cst_9 = arith.constant 6.400000e+01 : f32
    %17 = vector.broadcast %cst_9 : f32 to vector<16x1xf32>
    %18 = arith.divf %16, %17 : vector<16x1xf32>
    %cst_10 = arith.constant 9.99999974E-6 : f32
    %19 = vector.broadcast %cst_10 : f32 to vector<16x1xf32>
    %20 = arith.addf %18, %19 : vector<16x1xf32>
    %21 = math.rsqrt %20 : vector<16x1xf32>
    %22 = vector.broadcast %21 : vector<16x1xf32> to vector<16x64xf32>
    %23 = arith.mulf %13, %22 : vector<16x64xf32>
    %c0_11 = arith.constant 0 : index
    %c0_12 = arith.constant 0 : index
    %24 = vector.load %arg4[%c0_11, %c0_12] : memref<1x64xf32, #tpu.memory_space<vmem>>, vector<1x64xf32>
    %25 = vector.broadcast %24 : vector<1x64xf32> to vector<16x64xf32>
    %26 = arith.mulf %23, %25 : vector<16x64xf32>
    %c0_13 = arith.constant 0 : index
    %c0_14 = arith.constant 0 : index
    %27 = vector.load %arg5[%c0_13, %c0_14] : memref<1x64xf32, #tpu.memory_space<vmem>>, vector<1x64xf32>
    %28 = vector.broadcast %27 : vector<1x64xf32> to vector<16x64xf32>
    %29 = arith.addf %26, %28 : vector<16x64xf32>
    %c0_15 = arith.constant 0 : index
    %c0_16 = arith.constant 0 : index
    %30 = vector.load %arg6[%c0_15, %c0_16] : memref<64x32xf32, #tpu.memory_space<vmem>>, vector<64x32xf32>
    %cst_17 = arith.constant dense<0.000000e+00> : vector<16x32xf32>
    %31 = tpu.matmul %29, %30, %cst_17 {dimension_numbers = #tpu.dot_dimension_numbers<[1], [0], [0], [1], [0, 0, 1, 1], [], []>} : vector<16x64xf32>, vector<64x32xf32>, vector<16x32xf32> -> vector<16x32xf32>
    %c0_18 = arith.constant 0 : index
    %c0_19 = arith.constant 0 : index
    %32 = vector.load %arg7[%c0_18, %c0_19] : memref<1x32xf32, #tpu.memory_space<vmem>>, vector<1x32xf32>
    %33 = vector.broadcast %32 : vector<1x32xf32> to vector<16x32xf32>
    %34 = arith.addf %31, %33 : vector<16x32xf32>
    %35 = arith.addf %0, %34 : vector<16x32xf32>
    %c0_20 = arith.constant 0 : index
    %c0_21 = arith.constant 0 : index
    %36 = vector.load %arg8[%c0_20, %c0_21] : memref<16x32xf32, #tpu.memory_space<vmem>>, vector<16x32xf32>
    tpu.vector_store %arg8[%c0_20, %c0_21], %35 {strides = array<i32>} : memref<16x32xf32, #tpu.memory_space<vmem>>, vector<16x32xf32>,
    return
  }
  func.func @transform_0(%arg0: i32) -> (i32, i32) {
    %c0_i32 = arith.constant 0 : i32
    %c0_i32_0 = arith.constant 0 : i32
    return %arg0, %c0_i32 : i32, i32
  }
  func.func @transform_1(%arg0: i32) -> (i32, i32) {
    %c0_i32 = arith.constant 0 : i32
    %c0_i32_0 = arith.constant 0 : i32
    %c0_i32_1 = arith.constant 0 : i32
    return %c0_i32, %c0_i32_0 : i32, i32
  }
  func.func @transform_2(%arg0: i32) -> (i32, i32) {
    %c0_i32 = arith.constant 0 : i32
    %c0_i32_0 = arith.constant 0 : i32
    %c0_i32_1 = arith.constant 0 : i32
    return %c0_i32, %c0_i32_0 : i32, i32
  }
  func.func @transform_3(%arg0: i32) -> (i32, i32) {
    %c0_i32 = arith.constant 0 : i32
    %c0_i32_0 = arith.constant 0 : i32
    %c0_i32_1 = arith.constant 0 : i32
    return %c0_i32, %c0_i32_0 : i32, i32
  }
  func.func @transform_4(%arg0: i32) -> (i32, i32) {
    %c0_i32 = arith.constant 0 : i32
    %c0_i32_0 = arith.constant 0 : i32
    %c0_i32_1 = arith.constant 0 : i32
    return %c0_i32, %c0_i32_0 : i32, i32
  }
  func.func @transform_5(%arg0: i32) -> (i32, i32) {
    %c0_i32 = arith.constant 0 : i32
    %c0_i32_0 = arith.constant 0 : i32
    %c0_i32_1 = arith.constant 0 : i32
    return %c0_i32, %c0_i32_0 : i32, i32
  }
  func.func @transform_6(%arg0: i32) -> (i32, i32) {
    %c0_i32 = arith.constant 0 : i32
    %c0_i32_0 = arith.constant 0 : i32
    %c0_i32_1 = arith.constant 0 : i32
    return %c0_i32, %c0_i32_0 : i32, i32
  }
  func.func @transform_7(%arg0: i32) -> (i32, i32) {
    %c0_i32 = arith.constant 0 : i32
    %c0_i32_0 = arith.constant 0 : i32
    return %arg0, %c0_i32 : i32, i32
  }
}

</mosaic_0001>

<llo_original>
// kernel: tpu_custom_call.1
$region0: #{tpu_custom_call.1}
  #allocation0 [shape = 'u32[]', space=smem, size = 0x4, offset = 0x4, fixed_abs, tag = 'smem constant byte address 0x4 - core index']
  #allocation1 [shape = 'u32[144,128]{1,0:T(1,128)}', space=vmem, size = 0x12000, scoped, tag = 'internal scratch']
  %s0 = inlined_call_operand.vmem [shape: f32[16,32], index: 0, kind: input, shape index: {}]
  %s1 = inlined_call_operand.vmem [shape: f32[32,64], index: 1, kind: input, shape index: {}]
  %s2 = inlined_call_operand.vmem [shape: f32[1,64], index: 2, kind: input, shape index: {}]
  %s3 = inlined_call_operand.vmem [shape: f32[1,64], index: 3, kind: input, shape index: {}]
  %s4 = inlined_call_operand.vmem [shape: f32[1,64], index: 4, kind: input, shape index: {}]
  %s5 = inlined_call_operand.vmem [shape: f32[64,32], index: 5, kind: input, shape index: {}]
  %s6 = inlined_call_operand.vmem [shape: f32[1,32], index: 6, kind: input, shape index: {}]
  %s7 = inlined_call_operand.hbm [shape: f32[16,32], index: 7, kind: output, shape index: {}]
  %s8 = sld [smem:[#allocation0]]
  $region38: #{tpu_custom_call.1} parent=0
    _
  %s10 = ssub.s32 1, %s8
  %s11 = scalar_select 0, %s10, %s8
  $region1: #{tpu_custom_call.1} parent=0
    #allocation2 [shape = 'u8[8192]{0}', space=vmem, size = 0x2000, scoped, tag = 'output window, operand 0, single buffered']
    #allocation3 [shape = 's32[1]{0}', space=sflag, size = 0x4, scoped, tag = 'scoped memory for tpu_custom_call.1']
    %12 = vsyncpa [#allocation3], 0
    // Predicated region
    $region2: #{tpu_custom_call.1} parent=1 // pred_check
      _
    $region3: #{tpu_custom_call.1} parent=1 // pred_check_branch
      %14 = sbr.rel (0) target = $region5
    $region4: #{tpu_custom_call.1} parent=1 // pred_region
      _
    $region5: #{tpu_custom_call.1} parent=1 // pred_fallthru
      _
    // Predicated region
    $region6: #{tpu_custom_call.1} parent=1 // pred_check
      _
    $region7: #{tpu_custom_call.1} parent=1 // pred_check_branch
      %16 = sbr.rel (0) target = $region9
    $region8: #{tpu_custom_call.1} parent=1 // pred_region
      _
    $region9: #{tpu_custom_call.1} parent=1 // pred_fallthru
      _
    // Predicated region
    $region10: #{tpu_custom_call.1} parent=1 // pred_check
      _
    $region11: #{tpu_custom_call.1} parent=1 // pred_check_branch
      %18 = sbr.rel (0) target = $region13
    $region12: #{tpu_custom_call.1} parent=1 // pred_region
      _
    $region13: #{tpu_custom_call.1} parent=1 // pred_fallthru
      _
    // Predicated region
    $region14: #{tpu_custom_call.1} parent=1 // pred_check
      _
    $region15: #{tpu_custom_call.1} parent=1 // pred_check_branch
      %20 = sbr.rel (0) target = $region17
    $region16: #{tpu_custom_call.1} parent=1 // pred_region
      _
    $region17: #{tpu_custom_call.1} parent=1 // pred_fallthru
      _
    // Predicated region
    $region18: #{tpu_custom_call.1} parent=1 // pred_check
      _
    $region19: #{tpu_custom_call.1} parent=1 // pred_check_branch
      %22 = sbr.rel (0) target = $region21
    $region20: #{tpu_custom_call.1} parent=1 // pred_region
      _
    $region21: #{tpu_custom_call.1} parent=1 // pred_fallthru
      _
    // Predicated region
    $region22: #{tpu_custom_call.1} parent=1 // pred_check
      _
    $region23: #{tpu_custom_call.1} parent=1 // pred_check_branch
      %24 = sbr.rel (0) target = $region25
    $region24: #{tpu_custom_call.1} parent=1 // pred_region
      _
    $region25: #{tpu_custom_call.1} parent=1 // pred_fallthru
      _
    // Predicated region
    $region26: #{tpu_custom_call.1} parent=1 // pred_check
      _
    $region27: #{tpu_custom_call.1} parent=1 // pred_check_branch
      %26 = sbr.rel (0) target = $region29
    $region28: #{tpu_custom_call.1} parent=1 // pred_region
      _
    $region29: #{tpu_custom_call.1} parent=1 // pred_fallthru
      _
    %v27 = vld [vmem:[%s0] sm:$0xff]
    %v28 = vld [vmem:[%s0 + $0x8] sm:$0xff]
    %v29 = vld [vmem:[%s1] sm:$0xff]
    %v30 = vld [vmem:[%s1 + $0x8] sm:$0xff]
    %v31 = vld [vmem:[%s1 + $0x10] sm:$0xff]
    %v32 = vld [vmem:[%s1 + $0x18] sm:$0xff]
    %v33 = vld [vmem:[%s2] sm:$0x1]
    %v35 = vlaneseq
    %v36 = vshrl.u32 %v35, 7
    %v37 = vsub.s32 0, %v36
    %v38 = vrot.slane %v33, %v37
    %vm40 = vcmask 261120
    %v42 = vsel %vm40, %v27, 0
    %v45 = vsel %vm40, %v28, 0
    %47 = vmatprep.subr.mxu0 0.0
    %48 = vmatpush1.msra.mxu0 %v29
    %49 = vmatprep.subr.mxu0 0.0
    %50 = vmatpush1.msra.mxu0 %v30
    %51 = vmatprep.subr.mxu0 0.0
    %52 = vmatpush1.msra.mxu0 %v31
    %53 = vmatprep.subr.mxu0 0.0
    %54 = vmatpush1.msra.mxu0 %v32
    %55 = vmatprep.subr.mxu0 0.0
    %56 = vmatpush1.msra.mxu0 0.0
    %57 = vmatprep.subr.mxu0 0.0
    %58 = vmatpush1.msra.mxu0 0.0
    %59 = vmatprep.subr.mxu0 0.0
    %60 = vmatpush1.msra.mxu0 0.0
    %61 = vmatprep.subr.mxu0 0.0
    %62 = vmatpush1.msra.mxu0 0.0
    %63 = vmatprep.subr.mxu0 0.0
    %64 = vmatpush1.msra.mxu0 0.0
    %65 = vmatprep.subr.mxu0 0.0
    %66 = vmatpush1.msra.mxu0 0.0
    %67 = vmatprep.subr.mxu0 0.0
    %68 = vmatpush1.msra.mxu0 0.0
    %69 = vmatprep.subr.mxu0 0.0
    %70 = vmatpush1.msra.mxu0 0.0
    %71 = vmatprep.subr.mxu0 0.0
    %72 = vmatpush1.msra.mxu0 0.0
    %73 = vmatprep.subr.mxu0 0.0
    %74 = vmatpush1.msra.mxu0 0.0
    %75 = vmatprep.subr.mxu0 0.0
    %76 = vmatpush1.msra.mxu0 0.0
    %77 = vmatprep.subr.mxu0 0.0
    %78 = vmatpush1.msra.mxu0 0.0
    %79 = vmatprep.subr.mxu0 0.0
    %80 = vmatpush1.msra.mxu0 0.0
    %81 = vmatprep.subr.mxu0 0.0
    %82 = vmatpush1.msra.mxu0 0.0
    %83 = vmatprep.subr.mxu0 0.0
    %84 = vmatpush1.msra.mxu0 0.0
    %85 = vmatprep.subr.mxu0 0.0
    %86 = vmatpush1.msra.mxu0 0.0
    %87 = vmatprep.subr.mxu0 0.0
    %88 = vmatpush1.msra.mxu0 0.0
    %89 = vmatprep.subr.mxu0 0.0
    %90 = vmatpush1.msra.mxu0 0.0
    %91 = vmatprep.subr.mxu0 0.0
    %92 = vmatpush1.msra.mxu0 0.0
    %93 = vmatprep.subr.mxu0 0.0
    %94 = vmatpush1.msra.mxu0 0.0
    %95 = vmatprep.subr.mxu0 0.0
    %96 = vmatpush1.msra.mxu0 0.0
    %97 = vmatprep.subr.mxu0 0.0
    %98 = vmatpush1.msra.mxu0 0.0
    %99 = vmatprep.subr.mxu0 0.0
    %100 = vmatpush1.msra.mxu0 0.0
    %101 = vmatprep.subr.mxu0 0.0
    %102 = vmatpush1.msra.mxu0 0.0
    %103 = vmatprep.subr.mxu0 0.0
    %104 = vmatpush1.msra.mxu0 0.0
    %105 = vmatprep.subr.mxu0 0.0
    %106 = vmatpush1.msra.mxu0 0.0
    %107 = vmatprep.subr.mxu0 0.0
    %108 = vmatpush1.msra.mxu0 0.0
    %109 = vmatprep.subr.mxu0 0.0
    %110 = vmatpush1.msra.mxu0 0.0
    %111 = vmatprep.mubr.f32.mxu0 0.0
    %112 = vmatmul.mubr.f32.gmra.mrb[0].mxu0 %v42
    %v113 = vpop.f32.mrb[0].mxu0
    %v114 = vadd.f32 %v38, %v113
    %v115 = vpop.f32.mrb[0].mxu0
    %116 = vmatprep.mubr.f32.mxu0 0.0
    %117 = vmatmul.mubr.f32.gmra.mrb[0].mxu0 %v45
    %v118 = vpop.f32.mrb[0].mxu0
    %v119 = vadd.f32 %v38, %v118
    %v120 = vpop.f32.mrb[0].mxu0
    %121 = vdwg.mxu0
    %v122 = vmax.f32 %v114, 0.0
    %v123 = vmax.f32 %v119, 0.0
    %vm124 = vcmask 523264
    %v125 = vsel %vm124, %v122, 0.0
    %126 = vadd.xlane.f32.xlu0 %v125
    %v127 = vpop.xlane.xlu0 %126
    %v128 = vsel %vm124, %v123, 0.0
    %129 = vadd.xlane.f32.xlu0 %v128
    %v130 = vpop.xlane.xlu0 %129
    %v131 = vrcp.pop 64.0
    %v132 = vmul.f32 %v127, %v131
    %v133 = vmul.f32 %v130, %v131
    %v134 = vsub.f32 %v122, %v132
    %v135 = vsub.f32 %v123, %v133
    %v136 = vmul.f32 %v134, %v134
    %v137 = vmul.f32 %v135, %v135
    %v138 = vsel %vm124, %v136, 0.0
    %139 = vadd.xlane.f32.xlu0 %v138
    %v140 = vpop.xlane.xlu0 %139
    %v141 = vsel %vm124, %v137, 0.0
    %142 = vadd.xlane.f32.xlu0 %v141
    %v143 = vpop.xlane.xlu0 %142
    %v144 = vmul.f32 %v140, %v131
    %v145 = vmul.f32 %v143, %v131
    %v146 = vadd.f32 %v144, 1e-05
    %v147 = vadd.f32 %v145, 1e-05
    %v148 = vrsqrt.pop %v146
    %v149 = vrsqrt.pop %v147
    %v150 = vmul.f32 %v134, %v148
    %v151 = vmul.f32 %v135, %v149
    %v152 = vld [vmem:[%s3] sm:$0x1]
    %v154 = vlaneseq
    %v155 = vshrl.u32 %v154, 7
    %v156 = vsub.s32 0, %v155
    %v157 = vrot.slane %v152, %v156
    %v159 = vmul.f32 %v150, %v157
    %v160 = vmul.f32 %v151, %v157
    %v161 = vld [vmem:[%s4] sm:$0x1]
    %v163 = vlaneseq
    %v164 = vshrl.u32 %v163, 7
    %v165 = vsub.s32 0, %v164
    %v166 = vrot.slane %v161, %v165
    %v168 = vadd.f32 %v159, %v166
    %v169 = vadd.f32 %v160, %v166
    %v170 = vld [vmem:[%s5] sm:$0xff]
    %v171 = vld [vmem:[%s5 + $0x8] sm:$0xff]
    %v172 = vld [vmem:[%s5 + $0x10] sm:$0xff]
    %v173 = vld [vmem:[%s5 + $0x18] sm:$0xff]
    %v174 = vld [vmem:[%s5 + $0x20] sm:$0xff]
    %v175 = vld [vmem:[%s5 + $0x28] sm:$0xff]
    %v176 = vld [vmem:[%s5 + $0x30] sm:$0xff]
    %v177 = vld [vmem:[%s5 + $0x38] sm:$0xff]
    %v178 = vld [vmem:[%s6] sm:$0x1]
    %v180 = vlaneseq
    %v181 = vshrl.u32 %v180, 7
    %v182 = vsub.s32 0, %v181
    %v183 = vrot.slane %v178, %v182
    %v186 = vsel %vm124, %v168, 0
    %v189 = vsel %vm124, %v169, 0
    %191 = vmatprep.subr.mxu0 0.0
    %192 = vmatpush1.msra.mxu0 %v170
    %193 = vmatprep.subr.mxu0 0.0
    %194 = vmatpush1.msra.mxu0 %v171
    %195 = vmatprep.subr.mxu0 0.0
    %196 = vmatpush1.msra.mxu0 %v172
    %197 = vmatprep.subr.mxu0 0.0
    %198 = vmatpush1.msra.mxu0 %v173
    %199 = vmatprep.subr.mxu0 0.0
    %200 = vmatpush1.msra.mxu0 %v174
    %201 = vmatprep.subr.mxu0 0.0
    %202 = vmatpush1.msra.mxu0 %v175
    %203 = vmatprep.subr.mxu0 0.0
    %204 = vmatpush1.msra.mxu0 %v176
    %205 = vmatprep.subr.mxu0 0.0
    %206 = vmatpush1.msra.mxu0 %v177
    %207 = vmatprep.subr.mxu0 0.0
    %208 = vmatpush1.msra.mxu0 0.0
    %209 = vmatprep.subr.mxu0 0.0
    %210 = vmatpush1.msra.mxu0 0.0
    %211 = vmatprep.subr.mxu0 0.0
    %212 = vmatpush1.msra.mxu0 0.0
    %213 = vmatprep.subr.mxu0 0.0
    %214 = vmatpush1.msra.mxu0 0.0
    %215 = vmatprep.subr.mxu0 0.0
    %216 = vmatpush1.msra.mxu0 0.0
    %217 = vmatprep.subr.mxu0 0.0
    %218 = vmatpush1.msra.mxu0 0.0
    %219 = vmatprep.subr.mxu0 0.0
    %220 = vmatpush1.msra.mxu0 0.0
    %221 = vmatprep.subr.mxu0 0.0
    %222 = vmatpush1.msra.mxu0 0.0
    %223 = vmatprep.subr.mxu0 0.0
    %224 = vmatpush1.msra.mxu0 0.0
    %225 = vmatprep.subr.mxu0 0.0
    %226 = vmatpush1.msra.mxu0 0.0
    %227 = vmatprep.subr.mxu0 0.0
    %228 = vmatpush1.msra.mxu0 0.0
    %229 = vmatprep.subr.mxu0 0.0
    %230 = vmatpush1.msra.mxu0 0.0
    %231 = vmatprep.subr.mxu0 0.0
    %232 = vmatpush1.msra.mxu0 0.0
    %233 = vmatprep.subr.mxu0 0.0
    %234 = vmatpush1.msra.mxu0 0.0
    %235 = vmatprep.subr.mxu0 0.0
    %236 = vmatpush1.msra.mxu0 0.0
    %237 = vmatprep.subr.mxu0 0.0
    %238 = vmatpush1.msra.mxu0 0.0
    %239 = vmatprep.subr.mxu0 0.0
    %240 = vmatpush1.msra.mxu0 0.0
    %241 = vmatprep.subr.mxu0 0.0
    %242 = vmatpush1.msra.mxu0 0.0
    %243 = vmatprep.subr.mxu0 0.0
    %244 = vmatpush1.msra.mxu0 0.0
    %245 = vmatprep.subr.mxu0 0.0
    %246 = vmatpush1.msra.mxu0 0.0
    %247 = vmatprep.subr.mxu0 0.0
    %248 = vmatpush1.msra.mxu0 0.0
    %249 = vmatprep.subr.mxu0 0.0
    %250 = vmatpush1.msra.mxu0 0.0
    %251 = vmatprep.subr.mxu0 0.0
    %252 = vmatpush1.msra.mxu0 0.0
    %253 = vmatprep.subr.mxu0 0.0
    %254 = vmatpush1.msra.mxu0 0.0
    %255 = vmatprep.mubr.f32.mxu0 0.0
    %256 = vmatmul.mubr.f32.gmra.mrb[0].mxu0 %v186
    %v257 = vpop.f32.mrb[0].mxu0
    %v258 = vadd.f32 %v183, %v257
    %v259 = vpop.f32.mrb[0].mxu0
    %260 = vmatprep.mubr.f32.mxu0 0.0
    %261 = vmatmul.mubr.f32.gmra.mrb[0].mxu0 %v189
    %v262 = vpop.f32.mrb[0].mxu0
    %v263 = vadd.f32 %v183, %v262
    %v264 = vpop.f32.mrb[0].mxu0
    %265 = vdwg.mxu0
    %v266 = vadd.f32 %v27, %v258
    %v267 = vadd.f32 %v28, %v263
    %268 = vst.msk [vmem:[#allocation2] sm:$0xff] %vm40, %v266
    %269 = vst.msk [vmem:[#allocation2 + $0x8] sm:$0xff] %vm40, %v267
    // Predicated region
    $region30: #{tpu_custom_call.1} parent=1 // pred_check
      _
    $region31: #{tpu_custom_call.1} parent=1 // pred_check_branch
      %271 = sbr.rel (0) target = $region33
    $region32: #{tpu_custom_call.1} parent=1 // pred_region
      %s273 = ssub.s32 256, 256
      %274 = vsyncadd [#allocation3], %s273
      %s275 = sshll.u32 [#allocation2], 4
      %s276 = int_to_ptr.vmem [resolvable:$true] %s275
      %281 = dma.vmem_to_hbm [thread:$0]  %s276, 256, %s7, [#allocation3], 128, 128, 8
    $region33: #{tpu_custom_call.1} parent=1 // pred_fallthru
      _
    // Predicated region
    $region34: #{tpu_custom_call.1} parent=1 // pred_check
      _
    $region35: #{tpu_custom_call.1} parent=1 // pred_check_branch
      %283 = sbr.rel (0) target = $region37
    $region36: #{tpu_custom_call.1} parent=1 // pred_region
      %284 = dma.done [#allocation3], 256
    $region37: #{tpu_custom_call.1} parent=1 // pred_fallthru
      _
    %285 = vsyncpa [#allocation3], 1

// kernel: tpu_custom_call.1
$region0: #{tpu_custom_call.1}
  #allocation0 [shape = 'u32[]', space=smem, size = 0x4, offset = 0x4, fixed_abs, tag = 'smem constant byte address 0x4 - core index']
  #allocation1 [shape = 'u32[144,128]{1,0:T(1,128)}', space=vmem, size = 0x12000, scoped, tag = 'internal scratch']
  %s0 = inlined_call_operand.vmem [shape: f32[16,32], index: 0, kind: input, shape index: {}]
  %s1 = inlined_call_operand.vmem [shape: f32[32,64], index: 1, kind: input, shape index: {}]
  %s2 = inlined_call_operand.vmem [shape: f32[1,64], index: 2, kind: input, shape index: {}]
  %s3 = inlined_call_operand.vmem [shape: f32[1,64], index: 3, kind: input, shape index: {}]
  %s4 = inlined_call_operand.vmem [shape: f32[1,64], index: 4, kind: input, shape index: {}]
  %s5 = inlined_call_operand.vmem [shape: f32[64,32], index: 5, kind: input, shape index: {}]
  %s6 = inlined_call_operand.vmem [shape: f32[1,32], index: 6, kind: input, shape index: {}]
  %s7 = inlined_call_operand.hbm [shape: f32[16,32], index: 7, kind: output, shape index: {}]
  %s8 = sld [smem:[#allocation0]]
  $region38: #{tpu_custom_call.1} parent=0
    _
  %s10 = ssub.s32 1, %s8
  %s11 = scalar_select 0, %s10, %s8
  $region1: #{tpu_custom_call.1} parent=0
    #allocation2 [shape = 'u8[8192]{0}', space=vmem, size = 0x2000, scoped, tag = 'output window, operand 0, single buffered']
    #allocation3 [shape = 's32[1]{0}', space=sflag, size = 0x4, scoped, tag = 'scoped memory for tpu_custom_call.1']
    %12 = vsyncpa [#allocation3], 0
    // Predicated region
    $region2: #{tpu_custom_call.1} parent=1 // pred_check
      _
    $region3: #{tpu_custom_call.1} parent=1 // pred_check_branch
      %14 = sbr.rel (0) target = $region5
    $region4: #{tpu_custom_call.1} parent=1 // pred_region
      _
    $region5: #{tpu_custom_call.1} parent=1 // pred_fallthru
      _
    // Predicated region
    $region6: #{tpu_custom_call.1} parent=1 // pred_check
      _
    $region7: #{tpu_custom_call.1} parent=1 // pred_check_branch
      %16 = sbr.rel (0) target = $region9
    $region8: #{tpu_custom_call.1} parent=1 // pred_region
      _
    $region9: #{tpu_custom_call.1} parent=1 // pred_fallthru
      _
    // Predicated region
    $region10: #{tpu_custom_call.1} parent=1 // pred_check
      _
    $region11: #{tpu_custom_call.1} parent=1 // pred_check_branch
      %18 = sbr.rel (0) target = $region13
    $region12: #{tpu_custom_call.1} parent=1 // pred_region
      _
    $region13: #{tpu_custom_call.1} parent=1 // pred_fallthru
      _
    // Predicated region
    $region14: #{tpu_custom_call.1} parent=1 // pred_check
      _
    $region15: #{tpu_custom_call.1} parent=1 // pred_check_branch
      %20 = sbr.rel (0) target = $region17
    $region16: #{tpu_custom_call.1} parent=1 // pred_region
      _
    $region17: #{tpu_custom_call.1} parent=1 // pred_fallthru
      _
    // Predicated region
    $region18: #{tpu_custom_call.1} parent=1 // pred_check
      _
    $region19: #{tpu_custom_call.1} parent=1 // pred_check_branch
      %22 = sbr.rel (0) target = $region21
    $region20: #{tpu_custom_call.1} parent=1 // pred_region
      _
    $region21: #{tpu_custom_call.1} parent=1 // pred_fallthru
      _
    // Predicated region
    $region22: #{tpu_custom_call.1} parent=1 // pred_check
      _
    $region23: #{tpu_custom_call.1} parent=1 // pred_check_branch
      %24 = sbr.rel (0) target = $region25
    $region24: #{tpu_custom_call.1} parent=1 // pred_region
      _
    $region25: #{tpu_custom_call.1} parent=1 // pred_fallthru
      _
    // Predicated region
    $region26: #{tpu_custom_call.1} parent=1 // pred_check
      _
    $region27: #{tpu_custom_call.1} parent=1 // pred_check_branch
      %26 = sbr.rel (0) target = $region29
    $region28: #{tpu_custom_call.1} parent=1 // pred_region
      _
    $region29: #{tpu_custom_call.1} parent=1 // pred_fallthru
      _
    %v27 = vld [vmem:[%s0] sm:$0xff]
    %v28 = vld [vmem:[%s0 + $0x8] sm:$0xff]
    %v29 = vld [vmem:[%s1] sm:$0xff]
    %v30 = vld [vmem:[%s1 + $0x8] sm:$0xff]
    %v31 = vld [vmem:[%s1 + $0x10] sm:$0xff]
    %v32 = vld [vmem:[%s1 + $0x18] sm:$0xff]
    %v33 = vld [vmem:[%s2] sm:$0x1]
    %v35 = vlaneseq
    %v36 = vshrl.u32 %v35, 7
    %v37 = vsub.s32 0, %v36
    %v38 = vrot.slane %v33, %v37
    %vm40 = vcmask 261120
    %v42 = vsel %vm40, %v27, 0
    %v45 = vsel %vm40, %v28, 0
    %47 = vmatprep.subr.mxu0 0.0
    %48 = vmatpush1.msra.mxu0 %v29
    %49 = vmatprep.subr.mxu0 0.0
    %50 = vmatpush1.msra.mxu0 %v30
    %51 = vmatprep.subr.mxu0 0.0
    %52 = vmatpush1.msra.mxu0 %v31
    %53 = vmatprep.subr.mxu0 0.0
    %54 = vmatpush1.msra.mxu0 %v32
    %55 = vmatprep.subr.mxu0 0.0
    %56 = vmatpush1.msra.mxu0 0.0
    %57 = vmatprep.subr.mxu0 0.0
    %58 = vmatpush1.msra.mxu0 0.0
    %59 = vmatprep.subr.mxu0 0.0
    %60 = vmatpush1.msra.mxu0 0.0
    %61 = vmatprep.subr.mxu0 0.0
    %62 = vmatpush1.msra.mxu0 0.0
    %63 = vmatprep.subr.mxu0 0.0
    %64 = vmatpush1.msra.mxu0 0.0
    %65 = vmatprep.subr.mxu0 0.0
    %66 = vmatpush1.msra.mxu0 0.0
    %67 = vmatprep.subr.mxu0 0.0
    %68 = vmatpush1.msra.mxu0 0.0
    %69 = vmatprep.subr.mxu0 0.0
    %70 = vmatpush1.msra.mxu0 0.0
    %71 = vmatprep.subr.mxu0 0.0
    %72 = vmatpush1.msra.mxu0 0.0
    %73 = vmatprep.subr.mxu0 0.0
    %74 = vmatpush1.msra.mxu0 0.0
    %75 = vmatprep.subr.mxu0 0.0
    %76 = vmatpush1.msra.mxu0 0.0
    %77 = vmatprep.subr.mxu0 0.0
    %78 = vmatpush1.msra.mxu0 0.0
    %79 = vmatprep.subr.mxu0 0.0
    %80 = vmatpush1.msra.mxu0 0.0
    %81 = vmatprep.subr.mxu0 0.0
    %82 = vmatpush1.msra.mxu0 0.0
    %83 = vmatprep.subr.mxu0 0.0
    %84 = vmatpush1.msra.mxu0 0.0
    %85 = vmatprep.subr.mxu0 0.0
    %86 = vmatpush1.msra.mxu0 0.0
    %87 = vmatprep.subr.mxu0 0.0
    %88 = vmatpush1.msra.mxu0 0.0
    %89 = vmatprep.subr.mxu0 0.0
    %90 = vmatpush1.msra.mxu0 0.0
    %91 = vmatprep.subr.mxu0 0.0
    %92 = vmatpush1.msra.mxu0 0.0
    %93 = vmatprep.subr.mxu0 0.0
    %94 = vmatpush1.msra.mxu0 0.0
    %95 = vmatprep.subr.mxu0 0.0
    %96 = vmatpush1.msra.mxu0 0.0
    %97 = vmatprep.subr.mxu0 0.0
    %98 = vmatpush1.msra.mxu0 0.0
    %99 = vmatprep.subr.mxu0 0.0
    %100 = vmatpush1.msra.mxu0 0.0
    %101 = vmatprep.subr.mxu0 0.0
    %102 = vmatpush1.msra.mxu0 0.0
    %103 = vmatprep.subr.mxu0 0.0
    %104 = vmatpush1.msra.mxu0 0.0
    %105 = vmatprep.subr.mxu0 0.0
    %106 = vmatpush1.msra.mxu0 0.0
    %107 = vmatprep.subr.mxu0 0.0
    %108 = vmatpush1.msra.mxu0 0.0
    %109 = vmatprep.subr.mxu0 0.0
    %110 = vmatpush1.msra.mxu0 0.0
    %111 = vmatprep.mubr.f32.mxu0 0.0
    %112 = vmatmul.mubr.f32.gmra.mrb[0].mxu0 %v42
    %v113 = vpop.f32.mrb[0].mxu0
    %v114 = vadd.f32 %v38, %v113
    %v115 = vpop.f32.mrb[0].mxu0
    %116 = vmatprep.mubr.f32.mxu0 0.0
    %117 = vmatmul.mubr.f32.gmra.mrb[0].mxu0 %v45
    %v118 = vpop.f32.mrb[0].mxu0
    %v119 = vadd.f32 %v38, %v118
    %v120 = vpop.f32.mrb[0].mxu0
    %121 = vdwg.mxu0
    %v122 = vmax.f32 %v114, 0.0
    %v123 = vmax.f32 %v119, 0.0
    %vm124 = vcmask 523264
    %v125 = vsel %vm124, %v122, 0.0
    %126 = vadd.xlane.f32.xlu0 %v125
    %v127 = vpop.xlane.xlu0 %126
    %v128 = vsel %vm124, %v123, 0.0
    %129 = vadd.xlane.f32.xlu0 %v128
    %v130 = vpop.xlane.xlu0 %129
    %v131 = vrcp.pop 64.0
    %v132 = vmul.f32 %v127, %v131
    %v133 = vmul.f32 %v130, %v131
    %v134 = vsub.f32 %v122, %v132
    %v135 = vsub.f32 %v123, %v133
    %v136 = vmul.f32 %v134, %v134
    %v137 = vmul.f32 %v135, %v135
    %v138 = vsel %vm124, %v136, 0.0
    %139 = vadd.xlane.f32.xlu0 %v138
    %v140 = vpop.xlane.xlu0 %139
    %v141 = vsel %vm124, %v137, 0.0
    %142 = vadd.xlane.f32.xlu0 %v141
    %v143 = vpop.xlane.xlu0 %142
    %v144 = vmul.f32 %v140, %v131
    %v145 = vmul.f32 %v143, %v131
    %v146 = vadd.f32 %v144, 1e-05
    %v147 = vadd.f32 %v145, 1e-05
    %v148 = vrsqrt.pop %v146
    %v149 = vrsqrt.pop %v147
    %v150 = vmul.f32 %v134, %v148
    %v151 = vmul.f32 %v135, %v149
    %v152 = vld [vmem:[%s3] sm:$0x1]
    %v154 = vlaneseq
    %v155 = vshrl.u32 %v154, 7
    %v156 = vsub.s32 0, %v155
    %v157 = vrot.slane %v152, %v156
    %v159 = vmul.f32 %v150, %v157
    %v160 = vmul.f32 %v151, %v157
    %v161 = vld [vmem:[%s4] sm:$0x1]
    %v163 = vlaneseq
    %v164 = vshrl.u32 %v163, 7
    %v165 = vsub.s32 0, %v164
    %v166 = vrot.slane %v161, %v165
    %v168 = vadd.f32 %v159, %v166
    %v169 = vadd.f32 %v160, %v166
    %v170 = vld [vmem:[%s5] sm:$0xff]
    %v171 = vld [vmem:[%s5 + $0x8] sm:$0xff]
    %v172 = vld [vmem:[%s5 + $0x10] sm:$0xff]
    %v173 = vld [vmem:[%s5 + $0x18] sm:$0xff]
    %v174 = vld [vmem:[%s5 + $0x20] sm:$0xff]
    %v175 = vld [vmem:[%s5 + $0x28] sm:$0xff]
    %v176 = vld [vmem:[%s5 + $0x30] sm:$0xff]
    %v177 = vld [vmem:[%s5 + $0x38] sm:$0xff]
    %v178 = vld [vmem:[%s6] sm:$0x1]
    %v180 = vlaneseq
    %v181 = vshrl.u32 %v180, 7
    %v182 = vsub.s32 0, %v181
    %v183 = vrot.slane %v178, %v182
    %v186 = vsel %vm124, %v168, 0
    %v189 = vsel %vm124, %v169, 0
    %191 = vmatprep.subr.mxu0 0.0
    %192 = vmatpush1.msra.mxu0 %v170
    %193 = vmatprep.subr.mxu0 0.0
    %194 = vmatpush1.msra.mxu0 %v171
    %195 = vmatprep.subr.mxu0 0.0
    %196 = vmatpush1.msra.mxu0 %v172
    %197 = vmatprep.subr.mxu0 0.0
    %198 = vmatpush1.msra.mxu0 %v173
    %199 = vmatprep.subr.mxu0 0.0
    %200 = vmatpush1.msra.mxu0 %v174
    %201 = vmatprep.subr.mxu0 0.0
    %202 = vmatpush1.msra.mxu0 %v175
    %203 = vmatprep.subr.mxu0 0.0
    %204 = vmatpush1.msra.mxu0 %v176
    %205 = vmatprep.subr.mxu0 0.0
    %206 = vmatpush1.msra.mxu0 %v177
    %207 = vmatprep.subr.mxu0 0.0
    %208 = vmatpush1.msra.mxu0 0.0
    %209 = vmatprep.subr.mxu0 0.0
    %210 = vmatpush1.msra.mxu0 0.0
    %211 = vmatprep.subr.mxu0 0.0
    %212 = vmatpush1.msra.mxu0 0.0
    %213 = vmatprep.subr.mxu0 0.0
    %214 = vmatpush1.msra.mxu0 0.0
    %215 = vmatprep.subr.mxu0 0.0
    %216 = vmatpush1.msra.mxu0 0.0
    %217 = vmatprep.subr.mxu0 0.0
    %218 = vmatpush1.msra.mxu0 0.0
    %219 = vmatprep.subr.mxu0 0.0
    %220 = vmatpush1.msra.mxu0 0.0
    %221 = vmatprep.subr.mxu0 0.0
    %222 = vmatpush1.msra.mxu0 0.0
    %223 = vmatprep.subr.mxu0 0.0
    %224 = vmatpush1.msra.mxu0 0.0
    %225 = vmatprep.subr.mxu0 0.0
    %226 = vmatpush1.msra.mxu0 0.0
    %227 = vmatprep.subr.mxu0 0.0
    %228 = vmatpush1.msra.mxu0 0.0
    %229 = vmatprep.subr.mxu0 0.0
    %230 = vmatpush1.msra.mxu0 0.0
    %231 = vmatprep.subr.mxu0 0.0
    %232 = vmatpush1.msra.mxu0 0.0
    %233 = vmatprep.subr.mxu0 0.0
    %234 = vmatpush1.msra.mxu0 0.0
    %235 = vmatprep.subr.mxu0 0.0
    %236 = vmatpush1.msra.mxu0 0.0
    %237 = vmatprep.subr.mxu0 0.0
    %238 = vmatpush1.msra.mxu0 0.0
    %239 = vmatprep.subr.mxu0 0.0
    %240 = vmatpush1.msra.mxu0 0.0
    %241 = vmatprep.subr.mxu0 0.0
    %242 = vmatpush1.msra.mxu0 0.0
    %243 = vmatprep.subr.mxu0 0.0
    %244 = vmatpush1.msra.mxu0 0.0
    %245 = vmatprep.subr.mxu0 0.0
    %246 = vmatpush1.msra.mxu0 0.0
    %247 = vmatprep.subr.mxu0 0.0
    %248 = vmatpush1.msra.mxu0 0.0
    %249 = vmatprep.subr.mxu0 0.0
    %250 = vmatpush1.msra.mxu0 0.0
    %251 = vmatprep.subr.mxu0 0.0
    %252 = vmatpush1.msra.mxu0 0.0
    %253 = vmatprep.subr.mxu0 0.0
    %254 = vmatpush1.msra.mxu0 0.0
    %255 = vmatprep.mubr.f32.mxu0 0.0
    %256 = vmatmul.mubr.f32.gmra.mrb[0].mxu0 %v186
    %v257 = vpop.f32.mrb[0].mxu0
    %v258 = vadd.f32 %v183, %v257
    %v259 = vpop.f32.mrb[0].mxu0
    %260 = vmatprep.mubr.f32.mxu0 0.0
    %261 = vmatmul.mubr.f32.gmra.mrb[0].mxu0 %v189
    %v262 = vpop.f32.mrb[0].mxu0
    %v263 = vadd.f32 %v183, %v262
    %v264 = vpop.f32.mrb[0].mxu0
    %265 = vdwg.mxu0
    %v266 = vadd.f32 %v27, %v258
    %v267 = vadd.f32 %v28, %v263
    %268 = vst.msk [vmem:[#allocation2] sm:$0xff] %vm40, %v266
    %269 = vst.msk [vmem:[#allocation2 + $0x8] sm:$0xff] %vm40, %v267
    // Predicated region
    $region30: #{tpu_custom_call.1} parent=1 // pred_check
      _
    $region31: #{tpu_custom_call.1} parent=1 // pred_check_branch
      %271 = sbr.rel (0) target = $region33
    $region32: #{tpu_custom_call.1} parent=1 // pred_region
      %s273 = ssub.s32 256, 256
      %274 = vsyncadd [#allocation3], %s273
      %s275 = sshll.u32 [#allocation2], 4
      %s276 = int_to_ptr.vmem [resolvable:$true] %s275
      %281 = dma.vmem_to_hbm [thread:$0]  %s276, 256, %s7, [#allocation3], 128, 128, 8
    $region33: #{tpu_custom_call.1} parent=1 // pred_fallthru
      _
    // Predicated region
    $region34: #{tpu_custom_call.1} parent=1 // pred_check
      _
    $region35: #{tpu_custom_call.1} parent=1 // pred_check_branch
      %283 = sbr.rel (0) target = $region37
    $region36: #{tpu_custom_call.1} parent=1 // pred_region
      %284 = dma.done [#allocation3], 256
    $region37: #{tpu_custom_call.1} parent=1 // pred_fallthru
      _
    %285 = vsyncpa [#allocation3], 1

</llo_original>
